<compile_context>
chip_gen: v6e
topology: v6e:2x2x1
jax: 0.10.0
libtpu: 0.0.40
codegen_flags: <defaults>
</compile_context>

<pallas_src>
import functools

import jax
import jax.numpy as jnp
from jax.experimental import pallas as pl
from jax.experimental.pallas import tpu as pltpu

LN_EPS = 1e-5  # PyTorch nn.LayerNorm default


def _vmem_capacity_bytes():
    """Generation-aware physical VMEM (128 MiB v5e/v6e, 64 MiB v7x)."""
    try:
        cap = getattr(pltpu.get_tpu_info(), "vmem_capacity_bytes", None)
        if cap:
            return int(cap)
    except Exception:
        pass
    return 64 << 20  # conservative fallback = v7x physical VMEM


def _est_vmem_bytes(bm, tn, d_in, x_bytes, w_bytes, out_bytes, cache_ln):
    """Upper-bound VMEM use: double-buffered pipeline tiles + kernel temps."""
    est = 2 * bm * d_in * x_bytes        # x tile (double-buffered)
    est += 2 * d_in * tn * w_bytes       # weight tile (double-buffered)
    est += 2 * bm * tn * out_bytes       # output tile (double-buffered)
    est += 4 * d_in * 4 + 2 * tn * 4     # gamma/beta/bias buffers (f32 bound)
    est += 4 * bm * d_in * 4             # f32 LN temporaries + mm-dtype cast
    est += 2 * bm * tn * 4               # f32 accumulator + output cast copy
    if cache_ln:
        est += bm * d_in * w_bytes       # normalized-x VMEM scratch
    return est


def _linear_layer_kernel(x_ref, gamma_ref, beta_ref, w_ref, b_ref, o_ref,
                         *scratch, layer_norm: bool, relu: bool, mm_dtype,
                         cache_ln: bool):
    """Fused LayerNorm -> Linear(+bias) -> ReLU over one (rows, out-cols) tile."""

    def normalize():
        x = x_ref[...].astype(jnp.float32)                         # (bm, D_in)
        if layer_norm:
            mean = jnp.mean(x, axis=-1, keepdims=True)             # (bm, 1)
            cen = x - mean
            var = jnp.mean(cen * cen, axis=-1, keepdims=True)
            x = cen * jax.lax.rsqrt(var + LN_EPS)
            x = (x * gamma_ref[...].astype(jnp.float32)
                 + beta_ref[...].astype(jnp.float32))
        # MXU-native operand dtype (bf16 x bf16 -> f32 acc for bf16 models).
        return x.astype(mm_dtype)

    if cache_ln:
        # Columns are the inner grid axis: LN runs once per row tile (j == 0);
        # later column tiles reuse the cached normalized activations.
        xn_ref = scratch[0]

        @pl.when(pl.program_id(1) == 0)
        def _():
            xn_ref[...] = normalize()

        xn = xn_ref[...]
    else:
        xn = normalize()

    y = jnp.dot(xn, w_ref[...], preferred_element_type=jnp.float32)  # (bm, tn)
    y = y + b_ref[...].astype(jnp.float32)                            # (1, tn)
    if relu:
        y = jnp.maximum(y, 0.0)
    o_ref[...] = y.astype(o_ref.dtype)


def linear_layer_forward(x, gamma, beta, weight, bias,
                         *, layer_norm=True, relu=True):
    """x: (N, L, D_in) -> (N, L, D_out).  weight: (D_in, D_out), pre-transposed."""
    N, L, D_in = x.shape
    D_out = weight.shape[1]
    M = N * L

    # True bf16 x bf16 MXU path for bf16 models; f32 x f32 otherwise.
    # (Ideally the caller stores the weight in bf16 already -> this is a no-op.)
    mm_dtype = jnp.bfloat16 if x.dtype == jnp.bfloat16 else jnp.float32
    w2 = weight.astype(mm_dtype)

    x_bytes = x.dtype.itemsize
    w_bytes = jnp.dtype(mm_dtype).itemsize
    out_bytes = x_bytes

    # ---- generation-aware tile selection (no wrapper-side padding copies) ----
    cap = _vmem_capacity_bytes()
    target = int(cap * 0.7)          # headroom for Mosaic internal scratch

    if M < 8:
        bm_cands = [M]                                   # full-dim block (exempt)
    else:
        bm_cap = M if M % 8 == 0 else (M // 8) * 8       # sublane-aligned, <= M
        bm_cands = ([b for b in (512, 256, 128, 64, 32, 16, 8) if b <= bm_cap]
                    or [bm_cap])

    # Prefer a single column pass (grid_j == 1, full weight resident); fall back
    # to lane-dense 128-multiple column tiles when the weight tile is too big
    # for this generation's VMEM (v7x).
    tn_cands = [D_out] + [t for t in (1024, 512, 256, 128) if t < D_out]

    bm, tn = bm_cands[-1], tn_cands[-1]
    found = False
    for cand_tn in tn_cands:
        for cand_bm in bm_cands:
            cache = layer_norm and cand_tn < D_out
            if _est_vmem_bytes(cand_bm, cand_tn, D_in, x_bytes, w_bytes,
                               out_bytes, cache) <= target:
                bm, tn = cand_bm, cand_tn
                found = True
                break
        if found:
            break
    # TODO(synk): for very large D_in the untiled LayerNorm row may still not
    # fit VMEM; a K-tiled two-pass LN would be needed.

    grid_i = pl.cdiv(M, bm)       # row tiles (partial last block is masked)
    grid_j = pl.cdiv(D_out, tn)   # output-column tiles
    cache_ln = layer_norm and grid_j > 1

    x2 = x.reshape(M, D_in)
    gamma2 = gamma.reshape(1, D_in)
    beta2 = beta.reshape(1, D_in)
    b2 = bias.reshape(1, D_out)

    est = _est_vmem_bytes(bm, tn, D_in, x_bytes, w_bytes, out_bytes, cache_ln)
    vmem_limit = int(min(max(est + (8 << 20), 32 << 20), cap))

    kernel = functools.partial(_linear_layer_kernel, layer_norm=layer_norm,
                               relu=relu, mm_dtype=mm_dtype, cache_ln=cache_ln)

    scratch_shapes = [pltpu.VMEM((bm, D_in), mm_dtype)] if cache_ln else []
    # Rows outer ("parallel" for megacore), columns inner.  With grid_j == 1
    # the weight tile stays resident across all row tiles.  When the LN cache
    # is active, the column axis carries state -> "arbitrary".
    dim_sem = ("parallel", "arbitrary") if cache_ln else ("parallel", "parallel")

    out2 = pl.pallas_call(
        kernel,
        out_shape=jax.ShapeDtypeStruct((M, D_out), x.dtype),
        grid_spec=pltpu.PrefetchScalarGridSpec(
            num_scalar_prefetch=0,
            grid=(grid_i, grid_j),
            in_specs=[
                pl.BlockSpec((bm, D_in), lambda i, j: (i, 0)),    # x row tile
                pl.BlockSpec((1, D_in), lambda i, j: (0, 0)),     # LN gamma
                pl.BlockSpec((1, D_in), lambda i, j: (0, 0)),     # LN beta
                pl.BlockSpec((D_in, tn), lambda i, j: (0, j)),    # weight cols
                pl.BlockSpec((1, tn), lambda i, j: (0, j)),       # bias cols
            ],
            out_specs=pl.BlockSpec((bm, tn), lambda i, j: (i, j)),
            scratch_shapes=scratch_shapes,
        ),
        compiler_params=pltpu.CompilerParams(
            dimension_semantics=dim_sem,
            vmem_limit_bytes=vmem_limit),
    )(x2, gamma2, beta2, w2, b2)

    return out2.reshape(N, L, D_out)


def make_params(key, in_hsz, out_hsz):
    """Deterministic parameter init matching the module's shapes."""
    k_w, k_b = jax.random.split(key)
    bound = 1.0 / jnp.sqrt(in_hsz)
    # nn.Linear stores weight (out, in); we keep it pre-transposed as (in, out).
    weight = jax.random.uniform(k_w, (in_hsz, out_hsz), jnp.float32,
                                minval=-bound, maxval=bound)
    bias = jax.random.uniform(k_b, (out_hsz,), jnp.float32,
                              minval=-bound, maxval=bound)
    gamma = jnp.ones((in_hsz,), jnp.float32)   # LayerNorm weight
    beta = jnp.zeros((in_hsz,), jnp.float32)   # LayerNorm bias
    return gamma, beta, weight, bias


def _reference(x, gamma, beta, weight, bias):
    mean = jnp.mean(x, axis=-1, keepdims=True)
    var = jnp.mean((x - mean) ** 2, axis=-1, keepdims=True)
    xn = (x - mean) / jnp.sqrt(var + LN_EPS) * gamma + beta
    return jnp.maximum(xn @ weight + bias, 0.0)


if __name__ == "__main__":
    # Small demo shapes consistent with the module's (N, L, D) input.
    N, L, D_in, D_out = 2, 8, 32, 64

    key = jax.random.PRNGKey(0)
    k_x, k_p, k_x2 = jax.random.split(key, 3)
    x = jax.random.normal(k_x, (N, L, D_in), jnp.float32)
    gamma, beta, weight, bias = make_params(k_p, D_in, D_out)

    out = linear_layer_forward(x, gamma, beta, weight, bias,
                               layer_norm=True, relu=True)
    jax.block_until_ready(out)
    ref = _reference(x, gamma, beta, weight, bias)
    assert out.shape == (N, L, D_out)
    assert jnp.allclose(out, ref, atol=1e-5, rtol=1e-5)

    # Remainder path: N*L not a multiple of the row tile (masked edge block).
    x_b = jax.random.normal(k_x2, (3, 7, D_in), jnp.float32)
    out_b = linear_layer_forward(x_b, gamma, beta, weight, bias,
                                 layer_norm=True, relu=True)
    jax.block_until_ready(out_b)
    ref_b = _reference(x_b, gamma, beta, weight, bias)
    assert out_b.shape == (3, 7, D_out)
    assert jnp.allclose(out_b, ref_b, atol=1e-5, rtol=1e-5)

    print("KERNEL_OK")
</pallas_src>

<mosaic_0001>
module attributes {stable_mosaic.version = 11 : i64} {
  func.func @_linear_layer_kernel(%arg0: i32, %arg1: i32, %arg2: memref<16x32xf32, #tpu.memory_space<vmem>>, %arg3: memref<1x32xf32, #tpu.memory_space<vmem>>, %arg4: memref<1x32xf32, #tpu.memory_space<vmem>>, %arg5: memref<32x64xf32, #tpu.memory_space<vmem>>, %arg6: memref<1x64xf32, #tpu.memory_space<vmem>>, %arg7: memref<16x64xf32, #tpu.memory_space<vmem>>) attributes {dimension_semantics = [#tpu.dimension_semantics<parallel>, #tpu.dimension_semantics<parallel>], iteration_bounds = array<i64: 1, 1>, scalar_prefetch = 0 : i64, scratch_operands = 0 : i64, tpu.core_type = #tpu.core_type<tc>, window_params = [{transform_indices = @transform_0, window_bounds = array<i64: 16, 32>}, {pipeline_mode = #tpu.pipeline_mode<synchronous>, transform_indices = @transform_1, window_bounds = array<i64: 1, 32>}, {pipeline_mode = #tpu.pipeline_mode<synchronous>, transform_indices = @transform_2, window_bounds = array<i64: 1, 32>}, {transform_indices = @transform_3, window_bounds = array<i64: 32, 64>}, {transform_indices = @transform_4, window_bounds = array<i64: 1, 64>}, {transform_indices = @transform_5, window_bounds = array<i64: 16, 64>}]} {
    %c0 = arith.constant 0 : index
    %c0_0 = arith.constant 0 : index
    %0 = vector.load %arg2[%c0, %c0_0] : memref<16x32xf32, #tpu.memory_space<vmem>>, vector<16x32xf32>
    %cst = arith.constant dense<0.000000e+00> : vector<16xf32>
    %1 = vector.multi_reduction <add>, %0, %cst [1] : vector<16x32xf32> to vector<16xf32>
    %2 = vector.shape_cast %1 : vector<16xf32> to vector<16x1xf32>
    %cst_1 = arith.constant 3.200000e+01 : f32
    %3 = vector.broadcast %cst_1 : f32 to vector<16x1xf32>
    %4 = arith.divf %2, %3 : vector<16x1xf32>
    %5 = vector.broadcast %4 : vector<16x1xf32> to vector<16x32xf32>
    %6 = arith.subf %0, %5 : vector<16x32xf32>
    %7 = arith.mulf %6, %6 : vector<16x32xf32>
    %cst_2 = arith.constant dense<0.000000e+00> : vector<16xf32>
    %8 = vector.multi_reduction <add>, %7, %cst_2 [1] : vector<16x32xf32> to vector<16xf32>
    %9 = vector.shape_cast %8 : vector<16xf32> to vector<16x1xf32>
    %cst_3 = arith.constant 3.200000e+01 : f32
    %10 = vector.broadcast %cst_3 : f32 to vector<16x1xf32>
    %11 = arith.divf %9, %10 : vector<16x1xf32>
    %cst_4 = arith.constant 9.99999974E-6 : f32
    %12 = vector.broadcast %cst_4 : f32 to vector<16x1xf32>
    %13 = arith.addf %11, %12 : vector<16x1xf32>
    %14 = math.rsqrt %13 : vector<16x1xf32>
    %15 = vector.broadcast %14 : vector<16x1xf32> to vector<16x32xf32>
    %16 = arith.mulf %6, %15 : vector<16x32xf32>
    %c0_5 = arith.constant 0 : index
    %c0_6 = arith.constant 0 : index
    %17 = vector.load %arg3[%c0_5, %c0_6] : memref<1x32xf32, #tpu.memory_space<vmem>>, vector<1x32xf32>
    %18 = vector.broadcast %17 : vector<1x32xf32> to vector<16x32xf32>
    %19 = arith.mulf %16, %18 : vector<16x32xf32>
    %c0_7 = arith.constant 0 : index
    %c0_8 = arith.constant 0 : index
    %20 = vector.load %arg4[%c0_7, %c0_8] : memref<1x32xf32, #tpu.memory_space<vmem>>, vector<1x32xf32>
    %21 = vector.broadcast %20 : vector<1x32xf32> to vector<16x32xf32>
    %22 = arith.addf %19, %21 : vector<16x32xf32>
    %c0_9 = arith.constant 0 : index
    %c0_10 = arith.constant 0 : index
    %23 = vector.load %arg5[%c0_9, %c0_10] : memref<32x64xf32, #tpu.memory_space<vmem>>, vector<32x64xf32>
    %cst_11 = arith.constant dense<0.000000e+00> : vector<16x64xf32>
    %24 = tpu.matmul %22, %23, %cst_11 {dimension_numbers = #tpu.dot_dimension_numbers<[1], [0], [0], [1], [0, 0, 1, 1], [], []>} : vector<16x32xf32>, vector<32x64xf32>, vector<16x64xf32> -> vector<16x64xf32>
    %c0_12 = arith.constant 0 : index
    %c0_13 = arith.constant 0 : index
    %25 = vector.load %arg6[%c0_12, %c0_13] : memref<1x64xf32, #tpu.memory_space<vmem>>, vector<1x64xf32>
    %26 = vector.broadcast %25 : vector<1x64xf32> to vector<16x64xf32>
    %27 = arith.addf %24, %26 : vector<16x64xf32>
    %cst_14 = arith.constant 0.000000e+00 : f32
    %28 = vector.broadcast %cst_14 : f32 to vector<16x64xf32>
    %29 = arith.maximumf %27, %28 : vector<16x64xf32>
    %c0_15 = arith.constant 0 : index
    %c0_16 = arith.constant 0 : index
    %30 = vector.load %arg7[%c0_15, %c0_16] : memref<16x64xf32, #tpu.memory_space<vmem>>, vector<16x64xf32>
    tpu.vector_store %arg7[%c0_15, %c0_16], %29 {strides = array<i32>} : memref<16x64xf32, #tpu.memory_space<vmem>>, vector<16x64xf32>,
    return
  }
  func.func @transform_0(%arg0: i32, %arg1: i32) -> (i32, i32) {
    %c0_i32 = arith.constant 0 : i32
    %c0_i32_0 = arith.constant 0 : i32
    return %arg0, %c0_i32 : i32, i32
  }
  func.func @transform_1(%arg0: i32, %arg1: i32) -> (i32, i32) {
    %c0_i32 = arith.constant 0 : i32
    %c0_i32_0 = arith.constant 0 : i32
    %c0_i32_1 = arith.constant 0 : i32
    return %c0_i32, %c0_i32_0 : i32, i32
  }
  func.func @transform_2(%arg0: i32, %arg1: i32) -> (i32, i32) {
    %c0_i32 = arith.constant 0 : i32
    %c0_i32_0 = arith.constant 0 : i32
    %c0_i32_1 = arith.constant 0 : i32
    return %c0_i32, %c0_i32_0 : i32, i32
  }
  func.func @transform_3(%arg0: i32, %arg1: i32) -> (i32, i32) {
    %c0_i32 = arith.constant 0 : i32
    %c0_i32_0 = arith.constant 0 : i32
    return %c0_i32, %arg1 : i32, i32
  }
  func.func @transform_4(%arg0: i32, %arg1: i32) -> (i32, i32) {
    %c0_i32 = arith.constant 0 : i32
    %c0_i32_0 = arith.constant 0 : i32
    return %c0_i32, %arg1 : i32, i32
  }
  func.func @transform_5(%arg0: i32, %arg1: i32) -> (i32, i32) {
    %c0_i32 = arith.constant 0 : i32
    return %arg0, %arg1 : i32, i32
  }
}

</mosaic_0001>

<llo_original>
// kernel: tpu_custom_call.1
$region0: #{tpu_custom_call.1}
  #allocation0 [shape = 'u32[]', space=smem, size = 0x4, offset = 0x4, fixed_abs, tag = 'smem constant byte address 0x4 - core index']
  #allocation1 [shape = 'u32[144,128]{1,0:T(1,128)}', space=vmem, size = 0x12000, scoped, tag = 'internal scratch']
  %s0 = inlined_call_operand.hbm [shape: f32[16,32], index: 0, kind: input, shape index: {}]
  %s1 = inlined_call_operand.vmem [shape: f32[1,32], index: 1, kind: input, shape index: {}]
  %s2 = inlined_call_operand.vmem [shape: f32[1,32], index: 2, kind: input, shape index: {}]
  %s3 = inlined_call_operand.hbm [shape: f32[32,64], index: 3, kind: input, shape index: {}]
  %s4 = inlined_call_operand.vmem [shape: f32[1,64], index: 4, kind: input, shape index: {}]
  %s5 = inlined_call_operand.hbm [shape: f32[16,64], index: 5, kind: output, shape index: {}]
  %s6 = sld [smem:[#allocation0]]
  $region38: #{tpu_custom_call.1} parent=0
    _
  %s8 = ssub.s32 1, %s6
  %s9 = scalar_select 0, %s8, %s6
  $region1: #{tpu_custom_call.1} parent=0
    #allocation2 [shape = 'u8[8192]{0}', space=vmem, size = 0x2000, scoped, tag = 'input window, operand 0, single buffered']
    #allocation3 [shape = 's32[1]{0}', space=sflag, size = 0x4, scoped, tag = 'scoped memory for tpu_custom_call.1']
    #allocation4 [shape = 's32[1]{0}', space=sflag, size = 0x4, scoped, tag = 'scoped memory for tpu_custom_call.1']
    #allocation5 [shape = 'u8[16384]{0}', space=vmem, size = 0x4000, scoped, tag = 'input window, operand 3, single buffered']
    #allocation6 [shape = 's32[1]{0}', space=sflag, size = 0x4, scoped, tag = 'scoped memory for tpu_custom_call.1']
    #allocation7 [shape = 'u8[8192]{0}', space=vmem, size = 0x2000, scoped, tag = 'output window, operand 0, single buffered']
    %10 = vsyncpa [#allocation3], 0
    %11 = vsyncpa [#allocation6], 0
    %12 = vsyncpa [#allocation4], 0
    // Predicated region
    $region2: #{tpu_custom_call.1} parent=1 // pred_check
      _
    $region3: #{tpu_custom_call.1} parent=1 // pred_check_branch
      %14 = sbr.rel (0) target = $region5
    $region4: #{tpu_custom_call.1} parent=1 // pred_region
      %s16 = ssub.s32 256, 256
      %17 = vsyncadd [#allocation3], %s16
      %s18 = sshll.u32 [#allocation2], 4
      %s19 = int_to_ptr.vmem [resolvable:$true] %s18
      %24 = dma.hbm_to_vmem [thread:$0]  %s0, 256, %s19, [#allocation3], 128, 128, 8
    $region5: #{tpu_custom_call.1} parent=1 // pred_fallthru
      _
    // Predicated region
    $region6: #{tpu_custom_call.1} parent=1 // pred_check
      _
    $region7: #{tpu_custom_call.1} parent=1 // pred_check_branch
      %26 = sbr.rel (0) target = $region9
    $region8: #{tpu_custom_call.1} parent=1 // pred_region
      _
    $region9: #{tpu_custom_call.1} parent=1 // pred_fallthru
      _
    // Predicated region
    $region10: #{tpu_custom_call.1} parent=1 // pred_check
      _
    $region11: #{tpu_custom_call.1} parent=1 // pred_check_branch
      %28 = sbr.rel (0) target = $region13
    $region12: #{tpu_custom_call.1} parent=1 // pred_region
      _
    $region13: #{tpu_custom_call.1} parent=1 // pred_fallthru
      _
    // Predicated region
    $region14: #{tpu_custom_call.1} parent=1 // pred_check
      _
    $region15: #{tpu_custom_call.1} parent=1 // pred_check_branch
      %30 = sbr.rel (0) target = $region17
    $region16: #{tpu_custom_call.1} parent=1 // pred_region
      %s32 = ssub.s32 512, 512
      %33 = vsyncadd [#allocation6], %s32
      %s34 = sshll.u32 [#allocation5], 4
      %s35 = int_to_ptr.vmem [resolvable:$true] %s34
      %40 = dma.hbm_to_vmem [thread:$0]  %s3, 512, %s35, [#allocation6], 128, 128, 8
    $region17: #{tpu_custom_call.1} parent=1 // pred_fallthru
      _
    // Predicated region
    $region18: #{tpu_custom_call.1} parent=1 // pred_check
      _
    $region19: #{tpu_custom_call.1} parent=1 // pred_check_branch
      %42 = sbr.rel (0) target = $region21
    $region20: #{tpu_custom_call.1} parent=1 // pred_region
      _
    $region21: #{tpu_custom_call.1} parent=1 // pred_fallthru
      _
    // Predicated region
    $region22: #{tpu_custom_call.1} parent=1 // pred_check
      _
    $region23: #{tpu_custom_call.1} parent=1 // pred_check_branch
      %44 = sbr.rel (0) target = $region25
    $region24: #{tpu_custom_call.1} parent=1 // pred_region
      %45 = dma.done [#allocation3], 256
    $region25: #{tpu_custom_call.1} parent=1 // pred_fallthru
      _
    // Predicated region
    $region26: #{tpu_custom_call.1} parent=1 // pred_check
      _
    $region27: #{tpu_custom_call.1} parent=1 // pred_check_branch
      %47 = sbr.rel (0) target = $region29
    $region28: #{tpu_custom_call.1} parent=1 // pred_region
      %48 = dma.done [#allocation6], 512
    $region29: #{tpu_custom_call.1} parent=1 // pred_fallthru
      _
    %v49 = vld [vmem:[#allocation2] sm:$0xff]
    %v50 = vld [vmem:[#allocation2 + $0x8] sm:$0xff]
    %vm51 = vcmask 261120
    %v52 = vsel %vm51, %v49, 0.0
    %53 = vadd.xlane.f32.xlu0 %v52
    %v54 = vpop.xlane.xlu0 %53
    %v55 = vsel %vm51, %v50, 0.0
    %56 = vadd.xlane.f32.xlu0 %v55
    %v57 = vpop.xlane.xlu0 %56
    %v58 = vrcp.pop 32.0
    %v59 = vmul.f32 %v54, %v58
    %v60 = vmul.f32 %v57, %v58
    %v61 = vsub.f32 %v49, %v59
    %v62 = vsub.f32 %v50, %v60
    %v63 = vmul.f32 %v61, %v61
    %v64 = vmul.f32 %v62, %v62
    %v65 = vsel %vm51, %v63, 0.0
    %66 = vadd.xlane.f32.xlu0 %v65
    %v67 = vpop.xlane.xlu0 %66
    %v68 = vsel %vm51, %v64, 0.0
    %69 = vadd.xlane.f32.xlu0 %v68
    %v70 = vpop.xlane.xlu0 %69
    %v71 = vmul.f32 %v67, %v58
    %v72 = vmul.f32 %v70, %v58
    %v73 = vadd.f32 %v71, 1e-05
    %v74 = vadd.f32 %v72, 1e-05
    %v75 = vrsqrt.pop %v73
    %v76 = vrsqrt.pop %v74
    %v77 = vmul.f32 %v61, %v75
    %v78 = vmul.f32 %v62, %v76
    %v79 = vld [vmem:[%s1] sm:$0x1]
    %v81 = vlaneseq
    %v82 = vshrl.u32 %v81, 7
    %v83 = vsub.s32 0, %v82
    %v84 = vrot.slane %v79, %v83
    %v86 = vmul.f32 %v77, %v84
    %v87 = vmul.f32 %v78, %v84
    %v88 = vld [vmem:[%s2] sm:$0x1]
    %v90 = vlaneseq
    %v91 = vshrl.u32 %v90, 7
    %v92 = vsub.s32 0, %v91
    %v93 = vrot.slane %v88, %v92
    %v95 = vadd.f32 %v86, %v93
    %v96 = vadd.f32 %v87, %v93
    %v97 = vld [vmem:[#allocation5] sm:$0xff]
    %v98 = vld [vmem:[#allocation5 + $0x8] sm:$0xff]
    %v99 = vld [vmem:[#allocation5 + $0x10] sm:$0xff]
    %v100 = vld [vmem:[#allocation5 + $0x18] sm:$0xff]
    %v101 = vld [vmem:[%s4] sm:$0x1]
    %v103 = vlaneseq
    %v104 = vshrl.u32 %v103, 7
    %v105 = vsub.s32 0, %v104
    %v106 = vrot.slane %v101, %v105
    %v109 = vsel %vm51, %v95, 0
    %v112 = vsel %vm51, %v96, 0
    %114 = vmatprep.subr.mxu0 0.0
    %115 = vmatpush1.msra.mxu0 0.0
    %116 = vmatprep.subr.mxu0 0.0
    %117 = vmatpush1.msra.mxu0 0.0
    %118 = vmatprep.subr.mxu0 0.0
    %119 = vmatpush1.msra.mxu0 0.0
    %120 = vmatprep.subr.mxu0 0.0
    %121 = vmatpush1.msra.mxu0 0.0
    %122 = vmatprep.subr.mxu0 0.0
    %123 = vmatpush1.msra.mxu0 0.0
    %124 = vmatprep.subr.mxu0 0.0
    %125 = vmatpush1.msra.mxu0 0.0
    %126 = vmatprep.subr.mxu0 0.0
    %127 = vmatpush1.msra.mxu0 0.0
    %128 = vmatprep.subr.mxu0 0.0
    %129 = vmatpush1.msra.mxu0 0.0
    %130 = vmatprep.subr.mxu0 0.0
    %131 = vmatpush1.msra.mxu0 0.0
    %132 = vmatprep.subr.mxu0 0.0
    %133 = vmatpush1.msra.mxu0 0.0
    %134 = vmatprep.subr.mxu0 0.0
    %135 = vmatpush1.msra.mxu0 0.0
    %136 = vmatprep.subr.mxu0 0.0
    %137 = vmatpush1.msra.mxu0 0.0
    %138 = vmatprep.subr.mxu0 0.0
    %139 = vmatpush1.msra.mxu0 %v100
    %140 = vmatprep.subr.mxu0 0.0
    %141 = vmatpush1.msra.mxu0 %v99
    %142 = vmatprep.subr.mxu0 0.0
    %143 = vmatpush1.msra.mxu0 %v98
    %144 = vmatprep.subr.mxu0 0.0
    %145 = vmatpush1.msra.mxu0 %v97
    %146 = vmatprep.subr.mxu0 0.0
    %147 = vmatpush2.msra.mxu0 0.0
    %148 = vmatprep.subr.mxu0 0.0
    %149 = vmatpush2.msra.mxu0 0.0
    %150 = vmatprep.subr.mxu0 0.0
    %151 = vmatpush2.msra.mxu0 0.0
    %152 = vmatprep.subr.mxu0 0.0
    %153 = vmatpush2.msra.mxu0 0.0
    %154 = vmatprep.subr.mxu0 0.0
    %155 = vmatpush2.msra.mxu0 0.0
    %156 = vmatprep.subr.mxu0 0.0
    %157 = vmatpush2.msra.mxu0 0.0
    %158 = vmatprep.subr.mxu0 0.0
    %159 = vmatpush2.msra.mxu0 0.0
    %160 = vmatprep.subr.mxu0 0.0
    %161 = vmatpush2.msra.mxu0 0.0
    %162 = vmatprep.subr.mxu0 0.0
    %163 = vmatpush2.msra.mxu0 0.0
    %164 = vmatprep.subr.mxu0 0.0
    %165 = vmatpush2.msra.mxu0 0.0
    %166 = vmatprep.subr.mxu0 0.0
    %167 = vmatpush2.msra.mxu0 0.0
    %168 = vmatprep.subr.mxu0 0.0
    %169 = vmatpush2.msra.mxu0 0.0
    %170 = vmatprep.subr.mxu0 0.0
    %171 = vmatpush2.msra.mxu0 0.0
    %172 = vmatprep.subr.mxu0 0.0
    %173 = vmatpush2.msra.mxu0 0.0
    %174 = vmatprep.subr.mxu0 0.0
    %175 = vmatpush2.msra.mxu0 0.0
    %176 = vmatprep.subr.mxu0 0.0
    %177 = vmatpush2.msra.mxu0 0.0
    %178 = vmatprep.mubr.f32.mxu0 0.0
    %179 = vmatmul.mubr.f32.gmra.mxu0 %v109
    %v180 = vpop.f32.mrf.mxu0
    %v181 = vadd.f32 %v106, %v180
    %v182 = vpop.f32.mrf.mxu0
    %183 = vmatprep.mubr.f32.mxu0 0.0
    %184 = vmatmul.mubr.f32.gmra.mxu0 %v112
    %v185 = vpop.f32.mrf.mxu0
    %v186 = vadd.f32 %v106, %v185
    %v187 = vpop.f32.mrf.mxu0
    %188 = vdwg.mxu0
    %v189 = vmax.f32 %v181, 0.0
    %v190 = vmax.f32 %v186, 0.0
    %vm191 = vcmask 523264
    %192 = vst.msk [vmem:[#allocation7] sm:$0xff] %vm191, %v189
    %193 = vst.msk [vmem:[#allocation7 + $0x8] sm:$0xff] %vm191, %v190
    // Predicated region
    $region30: #{tpu_custom_call.1} parent=1 // pred_check
      _
    $region31: #{tpu_custom_call.1} parent=1 // pred_check_branch
      %195 = sbr.rel (0) target = $region33
    $region32: #{tpu_custom_call.1} parent=1 // pred_region
      %s197 = ssub.s32 256, 256
      %198 = vsyncadd [#allocation4], %s197
      %s199 = sshll.u32 [#allocation7], 4
      %s200 = int_to_ptr.vmem [resolvable:$true] %s199
      %205 = dma.vmem_to_hbm [thread:$0]  %s200, 256, %s5, [#allocation4], 128, 128, 8
    $region33: #{tpu_custom_call.1} parent=1 // pred_fallthru
      _
    // Predicated region
    $region34: #{tpu_custom_call.1} parent=1 // pred_check
      _
    $region35: #{tpu_custom_call.1} parent=1 // pred_check_branch
      %207 = sbr.rel (0) target = $region37
    $region36: #{tpu_custom_call.1} parent=1 // pred_region
      %208 = dma.done [#allocation4], 256
    $region37: #{tpu_custom_call.1} parent=1 // pred_fallthru
      _
    %209 = vsyncpa [#allocation3], 1
    %210 = vsyncpa [#allocation6], 1
    %211 = vsyncpa [#allocation4], 1

</llo_original>
